<compile_context>
chip_gen: v6e
topology: v6e:2x2x1
jax: 0.10.0
libtpu: 0.0.40
codegen_flags: <defaults>
</compile_context>

<pallas_src>
import functools

import jax
import jax.numpy as jnp
import numpy as np
from jax.experimental import pallas as pl
from jax.experimental.pallas import tpu as pltpu


def _round_up(n, m):
    return ((n + m - 1) // m) * m


def _cdiv(a, b):
    return -(-a // b)


def _sublane_gran(dtype):
    # Native sublane tiling: 8 rows for 4-byte, 16 for 2-byte, 32 for 1-byte.
    return max(8, 32 // jnp.dtype(dtype).itemsize)


def _pick_tile(dim, max_tile, gran, min_tiles=1):
    """Divisor-aware tile choice: cover `dim` with >= min_tiles tiles of size
    <= max_tile (multiple of `gran`) while minimizing pad waste."""
    dim_r = _round_up(dim, gran)
    nt = max(min_tiles, _cdiv(dim_r, max_tile))
    tile = min(_round_up(_cdiv(dim_r, nt), gran), dim_r)
    padded = _round_up(dim, tile)
    return tile, padded


def _divisor_rows(total, gran, max_rows):
    """Largest multiple of `gran` dividing `total`, capped at max_rows, so the
    row-norm pass never needs an extra pad copy of an already-padded array."""
    best = gran
    t = gran
    limit = min(total, max_rows)
    while t <= limit:
        if total % t == 0:
            best = t
        t += gran
    return best


# ---------------------------------------------------------------------------
# Pass 1: per-row inverse norms.  x_ref: (tr, H) -> o_ref: (tr, 1) f32
# ---------------------------------------------------------------------------
def _inv_norm_kernel(x_ref, o_ref, *, eps2, scale):
    x = x_ref[...].astype(jnp.float32)
    ss = jnp.sum(x * x, axis=-1, keepdims=True)
    # PyTorch clamps the norm by eps -> clamp the squared sum by eps^2.
    o_ref[...] = jax.lax.rsqrt(jnp.maximum(ss, eps2)) * scale


def _inv_norms(x2, *, eps, scale, vmem_budget=8 << 20):
    """x2: (R, H), R already tile-aligned -> (R, 1) f32 = scale/max(||row||,eps)."""
    R, H = x2.shape
    gran = _sublane_gran(x2.dtype)
    itemsize = jnp.dtype(x2.dtype).itemsize
    budget_rows = max(gran, vmem_budget // (2 * H * itemsize))  # 2 pipeline bufs
    tr = _divisor_rows(R, gran, min(budget_rows, 1024))
    kernel = functools.partial(
        _inv_norm_kernel, eps2=float(eps) ** 2, scale=float(scale))
    return pl.pallas_call(
        kernel,
        out_shape=jax.ShapeDtypeStruct((R, 1), jnp.float32),
        grid_spec=pltpu.PrefetchScalarGridSpec(
            num_scalar_prefetch=0,
            grid=(R // tr,),
            in_specs=[pl.BlockSpec((tr, H), lambda i: (i, 0))],
            out_specs=pl.BlockSpec((tr, 1), lambda i: (i, 0)),
        ),
        compiler_params=pltpu.CompilerParams(
            dimension_semantics=("parallel",)),
    )(x2)


# ---------------------------------------------------------------------------
# Pass 2: K-tiled scaled matmul.
#   x_ref: (tm, tk), y_ref: (tn, tk), ix_ref: (tm, 1), iy_ref: (1, tn)
#   -> o_ref: (tm, tn) lane-dense, acc_ref: (tm, tn) f32 scratch
# ---------------------------------------------------------------------------
def _scaled_matmul_kernel(x_ref, y_ref, ix_ref, iy_ref, o_ref, acc_ref, *,
                          mxu_dtype):
    @pl.when(pl.program_id(2) == 0)
    def _():
        acc_ref[...] = jnp.zeros_like(acc_ref)

    x = x_ref[...]
    y = y_ref[...]
    if mxu_dtype is not None:          # optional narrow-operand fast path
        x = x.astype(mxu_dtype)
        y = y.astype(mxu_dtype)
    # Contract the hidden dim of both raw operands (x @ y.T) on the MXU, f32 acc.
    acc_ref[...] += jax.lax.dot_general(
        x, y, (((1,), (1,)), ((), ())), preferred_element_type=jnp.float32)

    @pl.when(pl.program_id(2) == pl.num_programs(2) - 1)
    def _():
        # inv_x already carries 1/temp (folded), so the epilogue is just the
        # two broadcast cosine scales.
        o_ref[...] = (acc_ref[...] * ix_ref[...] * iy_ref[...]).astype(o_ref.dtype)


def _similarity_matmul(xm, ym, temp, *, eps, mxu_dtype=None,
                       tm_max=512, tn_max=256, tk_max=512):
    """xm: (M, H), ym: (N, H) -> (M, N) = cos(x_i, y_j) / temp."""
    if xm.dtype != ym.dtype:
        cd = jnp.promote_types(xm.dtype, ym.dtype)
        xm, ym = xm.astype(cd), ym.astype(cd)
    M, H = xm.shape
    N = ym.shape[0]
    gran = _sublane_gran(xm.dtype)

    # Row tiles: divisor-aware; ask for >=2 row tiles so both v7x TensorCores
    # get work even at small SimCSE batch sizes (grid axes are "parallel").
    min_m_tiles = 2 if M >= 2 * gran else 1
    tm, Mp = _pick_tile(M, tm_max, gran, min_tiles=min_m_tiles)
    # Column tile: multiple of 128 -> lane-dense, unmasked output stores.
    tn, Np = _pick_tile(N, tn_max, 128)
    # K tile: single pass for H <= 1024, else tile a 128-aligned padded H so
    # large-H configs still fit the default VMEM budget with big tm/tn.
    if H <= 1024:
        tk, Hp = H, H
    else:
        Hp = _round_up(H, 128)
        tk = next(t for t in (tk_max, 256, 128) if Hp % t == 0)

    if (Mp, Hp) != (M, H):
        xm = jnp.pad(xm, ((0, Mp - M), (0, Hp - H)))
    if (Np, Hp) != (N, H):
        ym = jnp.pad(ym, ((0, Np - N), (0, Hp - H)))
    # Zero-padded rows/cols: sum_sq -> eps^2 clamp, dot -> 0, so outputs stay 0.

    # Pass 1: per-row inverse norms (1/temp folded into x's inverse norm).
    inv_x = _inv_norms(xm, eps=eps, scale=1.0 / float(temp))         # (Mp, 1)
    inv_y = _inv_norms(ym, eps=eps, scale=1.0).reshape(1, Np)        # (1, Np)

    # Pass 2: K-tiled MXU matmul on raw tiles + scaling epilogue.
    kernel = functools.partial(_scaled_matmul_kernel, mxu_dtype=mxu_dtype)
    out = pl.pallas_call(
        kernel,
        out_shape=jax.ShapeDtypeStruct((Mp, Np), jnp.float32),
        grid_spec=pltpu.PrefetchScalarGridSpec(
            num_scalar_prefetch=0,
            grid=(Mp // tm, Np // tn, Hp // tk),
            in_specs=[
                pl.BlockSpec((tm, tk), lambda i, j, k: (i, k)),
                pl.BlockSpec((tn, tk), lambda i, j, k: (j, k)),
                pl.BlockSpec((tm, 1), lambda i, j, k: (i, 0)),
                pl.BlockSpec((1, tn), lambda i, j, k: (0, j)),
            ],
            out_specs=pl.BlockSpec((tm, tn), lambda i, j, k: (i, j)),
            scratch_shapes=[pltpu.VMEM((tm, tn), jnp.float32)],
        ),
        compiler_params=pltpu.CompilerParams(
            # Tiles fit each generation's *default* scoped-VMEM budget
            # (<= ~8 MiB double-buffered), so no vmem_limit_bytes request —
            # never ask for v7x's full 64 MiB physical VMEM.
            dimension_semantics=("parallel", "parallel", "arbitrary")),
    )(xm, ym, inv_x, inv_y)
    return out[:M, :N]


# ---------------------------------------------------------------------------
# Generic per-row cosine (fallback for arbitrary broadcast shapes).
# ---------------------------------------------------------------------------
def _cos_rows_kernel(x_ref, y_ref, o_ref, *, inv_temp, eps2):
    x = x_ref[...].astype(jnp.float32)
    y = y_ref[...].astype(jnp.float32)
    dot = jnp.sum(x * y, axis=-1, keepdims=True)
    xx = jnp.sum(x * x, axis=-1, keepdims=True)
    yy = jnp.sum(y * y, axis=-1, keepdims=True)
    # Fused epilogue: EUP rsqrt + VPU multiplies (no sqrt/divide chain).
    inv_x = jax.lax.rsqrt(jnp.maximum(xx, eps2))
    inv_y = jax.lax.rsqrt(jnp.maximum(yy, eps2))
    # (tile_rows, 1) output is masked-store but the kernel is input-BW bound.
    o_ref[...] = (dot * inv_x * inv_y * inv_temp).astype(o_ref.dtype)


def _similarity_rows(x, y, temp, *, eps, vmem_budget=8 << 20):
    # TODO(synk): non-outer-product mismatched broadcasts still materialize
    # jnp.broadcast_arrays (O(prod(batch)*H) HBM); equal shapes are free.
    xb, yb = jnp.broadcast_arrays(x, y)
    if xb.dtype != yb.dtype:
        cd = jnp.promote_types(xb.dtype, yb.dtype)
        xb, yb = xb.astype(cd), yb.astype(cd)
    batch_shape = xb.shape[:-1]
    H = xb.shape[-1]
    n_rows = int(np.prod(batch_shape)) if batch_shape else 1
    x2 = xb.reshape(n_rows, H)   # native dtype; f32 math happens in-kernel
    y2 = yb.reshape(n_rows, H)

    gran = _sublane_gran(x2.dtype)
    itemsize = jnp.dtype(x2.dtype).itemsize
    # 2 inputs x 2 pipeline buffers; tile rows derived from H and a per-step
    # VMEM budget that fits every generation's default scoped-VMEM limit.
    budget_rows = (vmem_budget // (4 * H * itemsize)) // gran * gran
    tile_rows = max(gran, min(budget_rows, 1024, _round_up(n_rows, gran)))
    n_total = _round_up(n_rows, tile_rows)
    if n_total != n_rows:
        x2 = jnp.pad(x2, ((0, n_total - n_rows), (0, 0)))
        y2 = jnp.pad(y2, ((0, n_total - n_rows), (0, 0)))

    kernel = functools.partial(
        _cos_rows_kernel, inv_temp=1.0 / float(temp), eps2=float(eps) ** 2)
    out = pl.pallas_call(
        kernel,
        out_shape=jax.ShapeDtypeStruct((n_total, 1), jnp.float32),
        grid_spec=pltpu.PrefetchScalarGridSpec(
            num_scalar_prefetch=0,
            grid=(n_total // tile_rows,),
            in_specs=[pl.BlockSpec((tile_rows, H), lambda i: (i, 0)),
                      pl.BlockSpec((tile_rows, H), lambda i: (i, 0))],
            out_specs=pl.BlockSpec((tile_rows, 1), lambda i: (i, 0)),
        ),
        compiler_params=pltpu.CompilerParams(
            dimension_semantics=("parallel",)),
    )(x2, y2)
    return out[:n_rows, 0].reshape(batch_shape)


# ---------------------------------------------------------------------------
# Public wrapper: Similarity.forward(x, y) = cos(x, y, dim=-1) / temp
# ---------------------------------------------------------------------------
def similarity(x, y, temp, *, eps=1e-8, mxu_dtype=None):
    """mxu_dtype: optionally downcast matmul operands in-kernel (e.g.
    jnp.bfloat16) for full-rate MXU on f32 inputs, trading exact f32 parity."""
    # SimCSE outer-product pattern: x=(M,1,H), y=(1,N,H) -> (M,N) matrix.
    if (x.ndim == 3 and y.ndim == 3 and x.shape[-1] == y.shape[-1]
            and x.shape[1] == 1 and y.shape[0] == 1):
        return _similarity_matmul(x[:, 0, :], y[0, :, :], temp, eps=eps,
                                  mxu_dtype=mxu_dtype)
    # Generic broadcast fallback (e.g. identical shapes).
    return _similarity_rows(x, y, temp, eps=eps)


def _reference(x, y, temp, eps=1e-8):
    xb, yb = jnp.broadcast_arrays(x.astype(jnp.float32), y.astype(jnp.float32))
    dot = jnp.sum(xb * yb, axis=-1)
    xn = jnp.maximum(jnp.linalg.norm(xb, axis=-1), eps)
    yn = jnp.maximum(jnp.linalg.norm(yb, axis=-1), eps)
    return dot / (xn * yn) / temp


if __name__ == "__main__":
    temp = 0.05  # typical SimCSE temperature
    key = jax.random.PRNGKey(0)
    k1, k2, k3, k4 = jax.random.split(key, 4)

    # SimCSE usage: x = z1.unsqueeze(1) -> (B,1,H), y = z2.unsqueeze(0) -> (1,B,H)
    batch, hidden = 8, 32
    x = jax.random.normal(k1, (batch, 1, hidden), dtype=jnp.float32)
    y = jax.random.normal(k2, (1, batch, hidden), dtype=jnp.float32)

    out = jax.block_until_ready(similarity(x, y, temp))
    assert out.shape == (batch, batch), out.shape
    np.testing.assert_allclose(np.asarray(out), np.asarray(_reference(x, y, temp)),
                               rtol=1e-5, atol=1e-5)

    # bf16 inputs: raw bf16 tiles feed the MXU at full rate (f32 accumulate).
    xb16, yb16 = x.astype(jnp.bfloat16), y.astype(jnp.bfloat16)
    outb = jax.block_until_ready(similarity(xb16, yb16, temp))
    np.testing.assert_allclose(np.asarray(outb),
                               np.asarray(_reference(xb16, yb16, temp)),
                               rtol=5e-3, atol=5e-3)

    # Optional narrow-operand fast path for f32 inputs (reduced precision).
    outc = jax.block_until_ready(similarity(x, y, temp, mxu_dtype=jnp.bfloat16))
    np.testing.assert_allclose(np.asarray(outc), np.asarray(_reference(x, y, temp)),
                               rtol=3e-2, atol=3e-1)

    # Generic (equal-shape) broadcast path.
    x2 = jax.random.normal(k3, (2, 8, hidden), dtype=jnp.float32)
    y2 = jax.random.normal(k4, (2, 8, hidden), dtype=jnp.float32)
    out2 = jax.block_until_ready(similarity(x2, y2, temp))
    assert out2.shape == (2, 8), out2.shape
    np.testing.assert_allclose(np.asarray(out2), np.asarray(_reference(x2, y2, temp)),
                               rtol=1e-5, atol=1e-5)

    print("KERNEL_OK")
</pallas_src>

<mosaic_0001>
module attributes {stable_mosaic.version = 11 : i64} {
  func.func @_inv_norm_kernel(%arg0: i32, %arg1: memref<8x32xf32, #tpu.memory_space<vmem>>, %arg2: memref<8x1xf32, #tpu.memory_space<vmem>>) attributes {dimension_semantics = [#tpu.dimension_semantics<parallel>], iteration_bounds = array<i64: 1>, scalar_prefetch = 0 : i64, scratch_operands = 0 : i64, tpu.core_type = #tpu.core_type<tc>, window_params = [{transform_indices = @transform_0, window_bounds = array<i64: 8, 32>}, {transform_indices = @transform_1, window_bounds = array<i64: 8, 1>}]} {
    %c0 = arith.constant 0 : index
    %c0_0 = arith.constant 0 : index
    %0 = vector.load %arg1[%c0, %c0_0] : memref<8x32xf32, #tpu.memory_space<vmem>>, vector<8x32xf32>
    %1 = arith.mulf %0, %0 : vector<8x32xf32>
    %cst = arith.constant dense<0.000000e+00> : vector<8xf32>
    %2 = vector.multi_reduction <add>, %1, %cst [1] : vector<8x32xf32> to vector<8xf32>
    %3 = vector.shape_cast %2 : vector<8xf32> to vector<8x1xf32>
    %cst_1 = arith.constant 1.000000e-16 : f32
    %4 = vector.broadcast %cst_1 : f32 to vector<8x1xf32>
    %5 = arith.maximumf %3, %4 : vector<8x1xf32>
    %6 = math.rsqrt %5 : vector<8x1xf32>
    %cst_2 = arith.constant 2.000000e+01 : f32
    %7 = vector.broadcast %cst_2 : f32 to vector<8x1xf32>
    %8 = arith.mulf %6, %7 : vector<8x1xf32>
    %c0_3 = arith.constant 0 : index
    %c0_4 = arith.constant 0 : index
    %9 = vector.load %arg2[%c0_3, %c0_4] : memref<8x1xf32, #tpu.memory_space<vmem>>, vector<8x1xf32>
    tpu.vector_store %arg2[%c0_3, %c0_4], %8 {strides = array<i32>} : memref<8x1xf32, #tpu.memory_space<vmem>>, vector<8x1xf32>,
    return
  }
  func.func @transform_0(%arg0: i32) -> (i32, i32) {
    %c0_i32 = arith.constant 0 : i32
    %c0_i32_0 = arith.constant 0 : i32
    return %arg0, %c0_i32 : i32, i32
  }
  func.func @transform_1(%arg0: i32) -> (i32, i32) {
    %c0_i32 = arith.constant 0 : i32
    %c0_i32_0 = arith.constant 0 : i32
    return %arg0, %c0_i32 : i32, i32
  }
}

</mosaic_0001>

<llo_original>
// kernel: tpu_custom_call.1
$region0: #{tpu_custom_call.1}
  #allocation0 [shape = 'u32[]', space=smem, size = 0x4, offset = 0x4, fixed_abs, tag = 'smem constant byte address 0x4 - core index']
  #allocation1 [shape = 'u32[144,128]{1,0:T(1,128)}', space=vmem, size = 0x12000, scoped, tag = 'internal scratch']
  %s0 = inlined_call_operand.hbm [shape: f32[8,32], index: 0, kind: input, shape index: {}]
  %s1 = inlined_call_operand.vmem [shape: f32[8,1], index: 1, kind: output, shape index: {}]
  %s2 = sld [smem:[#allocation0]]
  $region18: #{tpu_custom_call.1} parent=0
    _
  %s4 = ssub.s32 1, %s2
  %s5 = scalar_select 0, %s4, %s2
  $region1: #{tpu_custom_call.1} parent=0
    #allocation2 [shape = 'u8[4096]{0}', space=vmem, size = 0x1000, scoped, tag = 'input window, operand 0, single buffered']
    #allocation3 [shape = 's32[1]{0}', space=sflag, size = 0x4, scoped, tag = 'scoped memory for tpu_custom_call.1']
    %6 = vsyncpa [#allocation3], 0
    // Predicated region
    $region2: #{tpu_custom_call.1} parent=1 // pred_check
      _
    $region3: #{tpu_custom_call.1} parent=1 // pred_check_branch
      %8 = sbr.rel (0) target = $region5
    $region4: #{tpu_custom_call.1} parent=1 // pred_region
      %s10 = ssub.s32 128, 128
      %11 = vsyncadd [#allocation3], %s10
      %s13 = sshll.u32 [#allocation2], 4
      %s14 = int_to_ptr.vmem [resolvable:$true] %s13
      %16 = dma.hbm_to_vmem [thread:$0]  %s0, 128, %s14, [#allocation3]
    $region5: #{tpu_custom_call.1} parent=1 // pred_fallthru
      _
    // Predicated region
    $region6: #{tpu_custom_call.1} parent=1 // pred_check
      _
    $region7: #{tpu_custom_call.1} parent=1 // pred_check_branch
      %18 = sbr.rel (0) target = $region9
    $region8: #{tpu_custom_call.1} parent=1 // pred_region
      %19 = dma.done [#allocation3], 128
    $region9: #{tpu_custom_call.1} parent=1 // pred_fallthru
      _
    %v20 = vld [vmem:[#allocation2] sm:$0xff]
    %v21 = vmul.f32 %v20, %v20
    %vm22 = vcmask 261120
    %v23 = vsel %vm22, %v21, 0.0
    %24 = vadd.xlane.f32.xlu0 %v23
    %v25 = vpop.xlane.xlu0 %24
    %v26 = vmax.f32 %v25, 1e-16
    %v27 = vrsqrt.pop %v26
    %v28 = vmul.f32 %v27, 20.0
    %vm29 = vcmask 7168
    %30 = vst.msk [vmem:[%s1] sm:$0xff] %vm29, %v28
    // Predicated region
    $region10: #{tpu_custom_call.1} parent=1 // pred_check
      _
    $region11: #{tpu_custom_call.1} parent=1 // pred_check_branch
      %32 = sbr.rel (0) target = $region13
    $region12: #{tpu_custom_call.1} parent=1 // pred_region
      _
    $region13: #{tpu_custom_call.1} parent=1 // pred_fallthru
      _
    // Predicated region
    $region14: #{tpu_custom_call.1} parent=1 // pred_check
      _
    $region15: #{tpu_custom_call.1} parent=1 // pred_check_branch
      %34 = sbr.rel (0) target = $region17
    $region16: #{tpu_custom_call.1} parent=1 // pred_region
      _
    $region17: #{tpu_custom_call.1} parent=1 // pred_fallthru
      _
    %35 = vsyncpa [#allocation3], 1

</llo_original>
